<compile_context>
chip_gen: v7x
topology: tpu7x:2x2x1
jax: 0.10.0
libtpu: 0.0.40
codegen_flags: <defaults>
</compile_context>

<pallas_src>
import math

import jax
import jax.numpy as jnp
from jax.experimental import pallas as pl
from jax.experimental.pallas import tpu as pltpu


def _mlp_kernel(x_ref, w1_ref, b1_ref, w2_ref, b2_ref, o_ref, acc_ref=None):
    k = pl.program_id(1)
    acc = o_ref if acc_ref is None else acc_ref     # f32 accumulator either way

    @pl.when(k == 0)
    def _():
        acc[...] = jnp.zeros_like(acc)

    # ff1 slice: (TM, d_model) @ (d_model, TFF) -> f32 (TM, TFF)
    h = jnp.dot(x_ref[...], w1_ref[...], preferred_element_type=jnp.float32)
    h = h + b1_ref[...]                              # b1 kept in f32
    # exact GELU (erf form, f32) matching torch.nn.GELU() default
    h = 0.5 * h * (1.0 + jax.lax.erf(h * (1.0 / math.sqrt(2.0))))
    # partial ff2: bf16 (or caller-dtype) operands, f32 accumulation
    acc[...] += jnp.dot(h.astype(w2_ref.dtype), w2_ref[...],
                        preferred_element_type=jnp.float32).astype(acc.dtype)

    @pl.when(k == pl.num_programs(1) - 1)
    def _():
        if acc_ref is None:                          # accumulating in o_ref (f32)
            o_ref[...] += b2_ref[...].astype(o_ref.dtype)
        else:
            o_ref[...] = (acc_ref[...] + b2_ref[...]).astype(o_ref.dtype)


def _divisors(dim, align):
    """Divisors of `dim` that are multiples of `align`, descending."""
    out = []
    t = (dim // align) * align
    while t >= align:
        if dim % t == 0:
            out.append(t)
        t -= align
    return out


def _footprint_bytes(tm, tff, d_model, compute_itemsize, out_itemsize, need_acc):
    """Rough double-buffered VMEM footprint of one grid step."""
    fp = 2 * tm * d_model * compute_itemsize         # x tile
    fp += 2 * d_model * tff * compute_itemsize       # W1 slice
    fp += 2 * tff * d_model * compute_itemsize       # W2 slice
    fp += 2 * tff * 4 + 2 * d_model * 4              # f32 bias slices
    fp += 2 * tm * d_model * out_itemsize            # output tile
    if need_acc:
        fp += tm * d_model * 4                       # f32 accumulator scratch
    fp += 2 * tm * tff * 4                           # f32 hidden + cast copy
    return fp


def _choose_tiles(m, d_model, d_ff, compute_itemsize, out_itemsize, need_acc,
                  budget):
    # Row tiles: multiples of 16 (bf16 sublane packing), fall back to 8, then m.
    tm_cands = _divisors(m, 16) or _divisors(m, 8) or [m]
    # Keep at least 2 row tiles when m allows it (v7x megacore: i axis is
    # "parallel" and shards across the 2 TensorCores).
    if m >= 32:
        multi = [t for t in tm_cands if m // t >= 2]
        if multi:
            tm_cands = multi
    # d_ff tiles: multiples of 128 (lane axis of the W1 block) or the full d_ff.
    tff_cands = sorted(set(_divisors(d_ff, 128)) | {d_ff}, reverse=True)

    # Prioritize tm (divides total weight re-streaming), then the largest tff
    # that fits the budget; tff == d_ff means W1/W2 stay VMEM-resident.
    for tm in tm_cands:
        for tff in tff_cands:
            if _footprint_bytes(tm, tff, d_model, compute_itemsize,
                                out_itemsize, need_acc) <= budget:
                return tm, tff
    return tm_cands[-1], tff_cands[-1]


def mlp_pallas(x, w1, b1, w2, b2, *, compute_dtype=jnp.bfloat16):
    """x: (batch, seq, d_model); w1: (d_model, d_ff); w2: (d_ff, d_model)."""
    batch, seq, d_model = x.shape
    d_ff = w1.shape[1]
    m = batch * seq
    out_dtype = x.dtype

    cdtype = jnp.dtype(compute_dtype)
    citem = cdtype.itemsize
    oitem = jnp.dtype(out_dtype).itemsize

    x2d = x.reshape(m, d_model).astype(cdtype)
    w1c = w1.astype(cdtype)
    w2c = w2.astype(cdtype)
    b1_2d = b1.reshape(1, d_ff).astype(jnp.float32)
    b2_2d = b2.reshape(1, d_model).astype(jnp.float32)

    # f32 outputs accumulate directly in o_ref; scratch only for low-precision out.
    need_acc = out_dtype != jnp.float32

    # Actual per-TensorCore VMEM (64 MiB on v7x, 128 MiB on v5e/v6e).
    try:
        vmem_cap = int(pltpu.get_tpu_info().vmem_capacity_bytes)
    except Exception:
        vmem_cap = 64 << 20                          # conservative fallback
    hard_cap = min(int(vmem_cap * 0.85), 100 << 20)  # ~54 MiB on v7x, 100 MiB else
    tile_budget = max(hard_cap - (6 << 20), 16 << 20)  # compiler-scratch headroom

    tm, tff = _choose_tiles(m, d_model, d_ff, citem, oitem, need_acc, tile_budget)
    grid = (m // tm, d_ff // tff)
    num_i, num_k = grid

    footprint = _footprint_bytes(tm, tff, d_model, citem, oitem, need_acc)
    vmem_limit = int(min(hard_cap, max(32 << 20, footprint + (6 << 20))))

    # HBM traffic: weights are re-streamed once per row tile iff d_ff is tiled
    # (k is the inner grid axis); with tff == d_ff they are fetched exactly once.
    weight_bytes = 2 * d_model * d_ff * citem
    weight_bytes *= num_i if num_k > 1 else 1
    bytes_accessed = (m * d_model * citem            # x read
                      + weight_bytes                  # W1 + W2 (with revisits)
                      + (d_ff + d_model) * 4          # biases
                      + m * d_model * oitem)          # output write
    cost = pl.CostEstimate(
        flops=4 * m * d_model * d_ff,                 # two matmuls
        transcendentals=m * d_ff,                     # erf per hidden element
        bytes_accessed=int(bytes_accessed),
    )

    scratch = [pltpu.VMEM((tm, d_model), jnp.float32)] if need_acc else []

    out2d = pl.pallas_call(
        _mlp_kernel,
        out_shape=jax.ShapeDtypeStruct((m, d_model), out_dtype),
        grid=grid,
        in_specs=[
            pl.BlockSpec((tm, d_model), lambda i, k: (i, 0)),    # x row tile
            pl.BlockSpec((d_model, tff), lambda i, k: (0, k)),   # W1 d_ff slice
            pl.BlockSpec((1, tff), lambda i, k: (0, k)),         # b1 slice
            pl.BlockSpec((tff, d_model), lambda i, k: (k, 0)),   # W2 d_ff slice
            pl.BlockSpec((1, d_model), lambda i, k: (0, 0)),     # b2
        ],
        out_specs=pl.BlockSpec((tm, d_model), lambda i, k: (i, 0)),
        scratch_shapes=scratch,
        compiler_params=pltpu.CompilerParams(
            dimension_semantics=("parallel", "arbitrary"),
            vmem_limit_bytes=vmem_limit,
        ),
        cost_estimate=cost,
    )(x2d, w1c, b1_2d, w2c, b2_2d)

    return out2d.reshape(batch, seq, d_model)


def _init_params(key, d_model, d_ff, dtype=jnp.float32):
    # Deterministic synthetic init mimicking nn.Linear's uniform(-1/sqrt(fan_in), ...)
    k1, k2, k3, k4 = jax.random.split(key, 4)
    bound1 = 1.0 / math.sqrt(d_model)
    bound2 = 1.0 / math.sqrt(d_ff)
    w1 = jax.random.uniform(k1, (d_model, d_ff), dtype, -bound1, bound1)
    b1 = jax.random.uniform(k2, (d_ff,), dtype, -bound1, bound1)
    w2 = jax.random.uniform(k3, (d_ff, d_model), dtype, -bound2, bound2)
    b2 = jax.random.uniform(k4, (d_model,), dtype, -bound2, bound2)
    return w1, b1, w2, b2


if __name__ == "__main__":
    batch, seq, d_model, d_ff = 2, 8, 32, 64
    key = jax.random.PRNGKey(0)
    kx, kp = jax.random.split(key)
    x = jax.random.normal(kx, (batch, seq, d_model), jnp.float32)
    w1, b1, w2, b2 = _init_params(kp, d_model, d_ff)

    # pure-JAX f32 reference (exact erf GELU, same as torch.nn.GELU default)
    h_ref = x @ w1 + b1
    h_ref = 0.5 * h_ref * (1.0 + jax.lax.erf(h_ref / math.sqrt(2.0)))
    ref = h_ref @ w2 + b2

    # exactness path (f32 MXU operands) — tight tolerance
    out_f32 = mlp_pallas(x, w1, b1, w2, b2, compute_dtype=jnp.float32)
    jax.block_until_ready(out_f32)
    assert jnp.allclose(out_f32, ref, atol=1e-5, rtol=1e-5), "f32 path mismatch"

    # default fast path (bf16 MXU operands, f32 GELU/accumulate) — loose tolerance
    out_bf16 = mlp_pallas(x, w1, b1, w2, b2)
    jax.block_until_ready(out_bf16)
    assert jnp.allclose(out_bf16, ref, atol=5e-2, rtol=5e-2), "bf16 path mismatch"

    print("KERNEL_OK")
</pallas_src>

<mosaic_0001>
module attributes {stable_mosaic.version = 11 : i64} {
  func.func @_mlp_kernel(%arg0: i32, %arg1: i32, %arg2: memref<16x32xf32, #tpu.memory_space<vmem>>, %arg3: memref<32x64xf32, #tpu.memory_space<vmem>>, %arg4: memref<1x64xf32, #tpu.memory_space<vmem>>, %arg5: memref<64x32xf32, #tpu.memory_space<vmem>>, %arg6: memref<1x32xf32, #tpu.memory_space<vmem>>, %arg7: memref<16x32xf32, #tpu.memory_space<vmem>>) attributes {dimension_semantics = [#tpu.dimension_semantics<parallel>, #tpu.dimension_semantics<arbitrary>], iteration_bounds = array<i64: 1, 1>, scalar_prefetch = 0 : i64, scratch_operands = 0 : i64, tpu.core_type = #tpu.core_type<tc>, window_params = [{transform_indices = @transform_0, window_bounds = array<i64: 16, 32>}, {transform_indices = @transform_1, window_bounds = array<i64: 32, 64>}, {transform_indices = @transform_2, window_bounds = array<i64: 1, 64>}, {transform_indices = @transform_3, window_bounds = array<i64: 64, 32>}, {pipeline_mode = #tpu.pipeline_mode<synchronous>, transform_indices = @transform_4, window_bounds = array<i64: 1, 32>}, {transform_indices = @transform_5, window_bounds = array<i64: 16, 32>}]} {
    %c0_i32 = arith.constant 0 : i32
    %0 = arith.cmpi eq, %arg1, %c0_i32 : i32
    %1 = arith.extui %0 : i1 to i32
    %c0_i32_0 = arith.constant 0 : i32
    %2 = arith.cmpi ne, %1, %c0_i32_0 : i32
    scf.if %2 {
      %cst_18 = arith.constant 0.000000e+00 : f32
      %25 = vector.broadcast %cst_18 : f32 to vector<16x32xf32>
      %c0_19 = arith.constant 0 : index
      %c0_20 = arith.constant 0 : index
      %26 = vector.load %arg7[%c0_19, %c0_20] : memref<16x32xf32, #tpu.memory_space<vmem>>, vector<16x32xf32>
      tpu.vector_store %arg7[%c0_19, %c0_20], %25 {strides = array<i32>} : memref<16x32xf32, #tpu.memory_space<vmem>>, vector<16x32xf32>,
    } else {
    }
    %c0 = arith.constant 0 : index
    %c0_1 = arith.constant 0 : index
    %3 = vector.load %arg2[%c0, %c0_1] : memref<16x32xf32, #tpu.memory_space<vmem>>, vector<16x32xf32>
    %c0_2 = arith.constant 0 : index
    %c0_3 = arith.constant 0 : index
    %4 = vector.load %arg3[%c0_2, %c0_3] : memref<32x64xf32, #tpu.memory_space<vmem>>, vector<32x64xf32>
    %cst = arith.constant dense<0.000000e+00> : vector<16x64xf32>
    %5 = tpu.matmul %3, %4, %cst {dimension_numbers = #tpu.dot_dimension_numbers<[1], [0], [0], [1], [0, 0, 1, 1], [], []>} : vector<16x32xf32>, vector<32x64xf32>, vector<16x64xf32> -> vector<16x64xf32>
    %c0_4 = arith.constant 0 : index
    %c0_5 = arith.constant 0 : index
    %6 = vector.load %arg4[%c0_4, %c0_5] : memref<1x64xf32, #tpu.memory_space<vmem>>, vector<1x64xf32>
    %7 = vector.broadcast %6 : vector<1x64xf32> to vector<16x64xf32>
    %8 = arith.addf %5, %7 : vector<16x64xf32>
    %cst_6 = arith.constant 5.000000e-01 : f32
    %9 = vector.broadcast %cst_6 : f32 to vector<16x64xf32>
    %10 = arith.mulf %9, %8 : vector<16x64xf32>
    %cst_7 = arith.constant 0.707106769 : f32
    %11 = vector.broadcast %cst_7 : f32 to vector<16x64xf32>
    %12 = arith.mulf %8, %11 : vector<16x64xf32>
    %13 = math.erf %12 : vector<16x64xf32>
    %cst_8 = arith.constant 1.000000e+00 : f32
    %14 = vector.broadcast %cst_8 : f32 to vector<16x64xf32>
    %15 = arith.addf %14, %13 : vector<16x64xf32>
    %16 = arith.mulf %10, %15 : vector<16x64xf32>
    %c0_9 = arith.constant 0 : index
    %c0_10 = arith.constant 0 : index
    %17 = vector.load %arg7[%c0_9, %c0_10] : memref<16x32xf32, #tpu.memory_space<vmem>>, vector<16x32xf32>
    %c0_11 = arith.constant 0 : index
    %c0_12 = arith.constant 0 : index
    %18 = vector.load %arg5[%c0_11, %c0_12] : memref<64x32xf32, #tpu.memory_space<vmem>>, vector<64x32xf32>
    %cst_13 = arith.constant dense<0.000000e+00> : vector<16x32xf32>
    %19 = tpu.matmul %16, %18, %cst_13 {dimension_numbers = #tpu.dot_dimension_numbers<[1], [0], [0], [1], [0, 0, 1, 1], [], []>} : vector<16x64xf32>, vector<64x32xf32>, vector<16x32xf32> -> vector<16x32xf32>
    %20 = arith.addf %17, %19 : vector<16x32xf32>
    %c0_14 = arith.constant 0 : index
    %c0_15 = arith.constant 0 : index
    %21 = vector.load %arg7[%c0_14, %c0_15] : memref<16x32xf32, #tpu.memory_space<vmem>>, vector<16x32xf32>
    tpu.vector_store %arg7[%c0_14, %c0_15], %20 {strides = array<i32>} : memref<16x32xf32, #tpu.memory_space<vmem>>, vector<16x32xf32>,
    %c0_i32_16 = arith.constant 0 : i32
    %22 = arith.cmpi eq, %arg1, %c0_i32_16 : i32
    %23 = arith.extui %22 : i1 to i32
    %c0_i32_17 = arith.constant 0 : i32
    %24 = arith.cmpi ne, %23, %c0_i32_17 : i32
    scf.if %24 {
      %c0_18 = arith.constant 0 : index
      %c0_19 = arith.constant 0 : index
      %25 = vector.load %arg7[%c0_18, %c0_19] : memref<16x32xf32, #tpu.memory_space<vmem>>, vector<16x32xf32>
      %c0_20 = arith.constant 0 : index
      %c0_21 = arith.constant 0 : index
      %26 = vector.load %arg6[%c0_20, %c0_21] : memref<1x32xf32, #tpu.memory_space<vmem>>, vector<1x32xf32>
      %27 = vector.broadcast %26 : vector<1x32xf32> to vector<16x32xf32>
      %28 = arith.addf %25, %27 : vector<16x32xf32>
      %c0_22 = arith.constant 0 : index
      %c0_23 = arith.constant 0 : index
      %29 = vector.load %arg7[%c0_22, %c0_23] : memref<16x32xf32, #tpu.memory_space<vmem>>, vector<16x32xf32>
      tpu.vector_store %arg7[%c0_22, %c0_23], %28 {strides = array<i32>} : memref<16x32xf32, #tpu.memory_space<vmem>>, vector<16x32xf32>,
    } else {
    }
    return
  }
  func.func @transform_0(%arg0: i32, %arg1: i32) -> (i32, i32) {
    %c0_i32 = arith.constant 0 : i32
    %c0_i32_0 = arith.constant 0 : i32
    return %arg0, %c0_i32 : i32, i32
  }
  func.func @transform_1(%arg0: i32, %arg1: i32) -> (i32, i32) {
    %c0_i32 = arith.constant 0 : i32
    %c0_i32_0 = arith.constant 0 : i32
    return %c0_i32, %arg1 : i32, i32
  }
  func.func @transform_2(%arg0: i32, %arg1: i32) -> (i32, i32) {
    %c0_i32 = arith.constant 0 : i32
    %c0_i32_0 = arith.constant 0 : i32
    return %c0_i32, %arg1 : i32, i32
  }
  func.func @transform_3(%arg0: i32, %arg1: i32) -> (i32, i32) {
    %c0_i32 = arith.constant 0 : i32
    %c0_i32_0 = arith.constant 0 : i32
    return %arg1, %c0_i32 : i32, i32
  }
  func.func @transform_4(%arg0: i32, %arg1: i32) -> (i32, i32) {
    %c0_i32 = arith.constant 0 : i32
    %c0_i32_0 = arith.constant 0 : i32
    %c0_i32_1 = arith.constant 0 : i32
    return %c0_i32, %c0_i32_0 : i32, i32
  }
  func.func @transform_5(%arg0: i32, %arg1: i32) -> (i32, i32) {
    %c0_i32 = arith.constant 0 : i32
    %c0_i32_0 = arith.constant 0 : i32
    return %arg0, %c0_i32 : i32, i32
  }
}

</mosaic_0001>

<llo_original>
// kernel: tpu_custom_call.1
$region0: #{tpu_custom_call.1}
  #allocation0 [shape = 'u32[]', space=smem, size = 0x4, offset = 0x4, fixed_abs, tag = 'smem constant byte address 0x4 - core index']
  #allocation1 [shape = 'u32[144,128]{1,0:T(1,128)}', space=vmem, size = 0x12000, scoped, tag = 'internal scratch']
  %s0 = inlined_call_operand.vmem [shape: f32[16,32], index: 0, kind: input, shape index: {}]
  %s1 = inlined_call_operand.vmem [shape: f32[32,64], index: 1, kind: input, shape index: {}]
  %s2 = inlined_call_operand.vmem [shape: f32[1,64], index: 2, kind: input, shape index: {}]
  %s3 = inlined_call_operand.vmem [shape: f32[64,32], index: 3, kind: input, shape index: {}]
  %s4 = inlined_call_operand.vmem [shape: f32[1,32], index: 4, kind: input, shape index: {}]
  %s5 = inlined_call_operand.hbm [shape: f32[16,32], index: 5, kind: output, shape index: {}]
  %s6 = sld [smem:[#allocation0]]
  $region38: #{tpu_custom_call.1} parent=0
    _
  %s8 = ssub.s32 1, %s6
  %s9 = scalar_select 0, %s8, %s6
  $region1: #{tpu_custom_call.1} parent=0
    #allocation2 [shape = 'u8[8192]{0}', space=vmem, size = 0x2000, scoped, tag = 'output window, operand 0, single buffered']
    #allocation3 [shape = 's32[1]{0}', space=sflag, size = 0x4, scoped, tag = 'scoped memory for tpu_custom_call.1']
    %10 = vsyncpa [#allocation3], 0
    // Predicated region
    $region2: #{tpu_custom_call.1} parent=1 // pred_check
      _
    $region3: #{tpu_custom_call.1} parent=1 // pred_check_branch
      %12 = sbr.rel (0) target = $region5
    $region4: #{tpu_custom_call.1} parent=1 // pred_region
      _
    $region5: #{tpu_custom_call.1} parent=1 // pred_fallthru
      _
    // Predicated region
    $region6: #{tpu_custom_call.1} parent=1 // pred_check
      _
    $region7: #{tpu_custom_call.1} parent=1 // pred_check_branch
      %14 = sbr.rel (0) target = $region9
    $region8: #{tpu_custom_call.1} parent=1 // pred_region
      _
    $region9: #{tpu_custom_call.1} parent=1 // pred_fallthru
      _
    // Predicated region
    $region10: #{tpu_custom_call.1} parent=1 // pred_check
      _
    $region11: #{tpu_custom_call.1} parent=1 // pred_check_branch
      %16 = sbr.rel (0) target = $region13
    $region12: #{tpu_custom_call.1} parent=1 // pred_region
      _
    $region13: #{tpu_custom_call.1} parent=1 // pred_fallthru
      _
    // Predicated region
    $region14: #{tpu_custom_call.1} parent=1 // pred_check
      _
    $region15: #{tpu_custom_call.1} parent=1 // pred_check_branch
      %18 = sbr.rel (0) target = $region17
    $region16: #{tpu_custom_call.1} parent=1 // pred_region
      _
    $region17: #{tpu_custom_call.1} parent=1 // pred_fallthru
      _
    // Predicated region
    $region18: #{tpu_custom_call.1} parent=1 // pred_check
      _
    $region19: #{tpu_custom_call.1} parent=1 // pred_check_branch
      %20 = sbr.rel (0) target = $region21
    $region20: #{tpu_custom_call.1} parent=1 // pred_region
      _
    $region21: #{tpu_custom_call.1} parent=1 // pred_fallthru
      _
    %p21 = scmp.eq.s32.totalorder 0, 0
    // Predicated region
    $region22: #{tpu_custom_call.1} parent=1 // pred_check
      %p22 = pneg %p21
    $region23: #{tpu_custom_call.1} parent=1 // pred_check_branch
      %24 = sbr.rel (%p22) target = $region25
    $region24: #{tpu_custom_call.1} parent=1 // pred_region
      %vm25 = vcmask 261120
      %26 = vst.msk [vmem:[#allocation2] sm:$0xff] %vm25, 0.0
      %27 = vst.msk [vmem:[#allocation2 + $0x8] sm:$0xff] %vm25, 0.0
    $region25: #{tpu_custom_call.1} parent=1 // pred_fallthru
      _
    %v28 = vld [vmem:[%s0] sm:$0xff]
    %v29 = vld [vmem:[%s0 + $0x8] sm:$0xff]
    %v30 = vld [vmem:[%s1] sm:$0xff]
    %v31 = vld [vmem:[%s1 + $0x8] sm:$0xff]
    %v32 = vld [vmem:[%s1 + $0x10] sm:$0xff]
    %v33 = vld [vmem:[%s1 + $0x18] sm:$0xff]
    %v34 = vld [vmem:[%s2] sm:$0x1]
    %v36 = vlaneseq
    %v37 = vshrl.u32 %v36, 7
    %v38 = vsub.s32 0, %v37
    %v39 = vrot.slane %v34, %v38
    %vm41 = vcmask 261120
    %v43 = vsel %vm41, %v28, 0
    %v46 = vsel %vm41, %v29, 0
    %48 = vmatprep.subr.mxu0 0.0
    %49 = vmatpush1.msra.mxu0 %v30
    %50 = vmatprep.subr.mxu0 0.0
    %51 = vmatpush1.msra.mxu0 %v31
    %52 = vmatprep.subr.mxu0 0.0
    %53 = vmatpush1.msra.mxu0 %v32
    %54 = vmatprep.subr.mxu0 0.0
    %55 = vmatpush1.msra.mxu0 %v33
    %56 = vmatprep.subr.mxu0 0.0
    %57 = vmatpush1.msra.mxu0 0.0
    %58 = vmatprep.subr.mxu0 0.0
    %59 = vmatpush1.msra.mxu0 0.0
    %60 = vmatprep.subr.mxu0 0.0
    %61 = vmatpush1.msra.mxu0 0.0
    %62 = vmatprep.subr.mxu0 0.0
    %63 = vmatpush1.msra.mxu0 0.0
    %64 = vmatprep.subr.mxu0 0.0
    %65 = vmatpush1.msra.mxu0 0.0
    %66 = vmatprep.subr.mxu0 0.0
    %67 = vmatpush1.msra.mxu0 0.0
    %68 = vmatprep.subr.mxu0 0.0
    %69 = vmatpush1.msra.mxu0 0.0
    %70 = vmatprep.subr.mxu0 0.0
    %71 = vmatpush1.msra.mxu0 0.0
    %72 = vmatprep.subr.mxu0 0.0
    %73 = vmatpush1.msra.mxu0 0.0
    %74 = vmatprep.subr.mxu0 0.0
    %75 = vmatpush1.msra.mxu0 0.0
    %76 = vmatprep.subr.mxu0 0.0
    %77 = vmatpush1.msra.mxu0 0.0
    %78 = vmatprep.subr.mxu0 0.0
    %79 = vmatpush1.msra.mxu0 0.0
    %80 = vmatprep.subr.mxu0 0.0
    %81 = vmatpush1.msra.mxu0 0.0
    %82 = vmatprep.subr.mxu0 0.0
    %83 = vmatpush1.msra.mxu0 0.0
    %84 = vmatprep.subr.mxu0 0.0
    %85 = vmatpush1.msra.mxu0 0.0
    %86 = vmatprep.subr.mxu0 0.0
    %87 = vmatpush1.msra.mxu0 0.0
    %88 = vmatprep.subr.mxu0 0.0
    %89 = vmatpush1.msra.mxu0 0.0
    %90 = vmatprep.subr.mxu0 0.0
    %91 = vmatpush1.msra.mxu0 0.0
    %92 = vmatprep.subr.mxu0 0.0
    %93 = vmatpush1.msra.mxu0 0.0
    %94 = vmatprep.subr.mxu0 0.0
    %95 = vmatpush1.msra.mxu0 0.0
    %96 = vmatprep.subr.mxu0 0.0
    %97 = vmatpush1.msra.mxu0 0.0
    %98 = vmatprep.subr.mxu0 0.0
    %99 = vmatpush1.msra.mxu0 0.0
    %100 = vmatprep.subr.mxu0 0.0
    %101 = vmatpush1.msra.mxu0 0.0
    %102 = vmatprep.subr.mxu0 0.0
    %103 = vmatpush1.msra.mxu0 0.0
    %104 = vmatprep.subr.mxu0 0.0
    %105 = vmatpush1.msra.mxu0 0.0
    %106 = vmatprep.subr.mxu0 0.0
    %107 = vmatpush1.msra.mxu0 0.0
    %108 = vmatprep.subr.mxu0 0.0
    %109 = vmatpush1.msra.mxu0 0.0
    %110 = vmatprep.subr.mxu0 0.0
    %111 = vmatpush1.msra.mxu0 0.0
    %112 = vmatprep.mubr.f32.mxu0 0.0
    %113 = vmatmul.mubr.f32.gmra.mrb[0].mxu0 %v43
    %v114 = vpop.f32.mrb[0].mxu0
    %v115 = vadd.f32 %v39, %v114
    %v116 = vpop.f32.mrb[0].mxu0
    %117 = vmatprep.mubr.f32.mxu0 0.0
    %118 = vmatmul.mubr.f32.gmra.mrb[0].mxu0 %v46
    %v119 = vpop.f32.mrb[0].mxu0
    %v120 = vadd.f32 %v39, %v119
    %v121 = vpop.f32.mrb[0].mxu0
    %122 = vdwg.mxu0
    %v123 = vmul.f32 %v115, 0.5
    %v124 = vmul.f32 %v120, 0.5
    %v125 = vmul.f32 %v115, 0.70710677
    %v126 = vmul.f32 %v120, 0.70710677
    %v127 = verf.f32.pop %v125
    %v128 = verf.f32.pop %v126
    %v129 = vadd.f32 %v127, 1.0
    %v130 = vadd.f32 %v128, 1.0
    %v131 = vmul.f32 %v123, %v129
    %v132 = vmul.f32 %v124, %v130
    %v133 = vld [vmem:[#allocation2] sm:$0xff]
    %v134 = vld [vmem:[#allocation2 + $0x8] sm:$0xff]
    %v135 = vld [vmem:[%s3] sm:$0xff]
    %v136 = vld [vmem:[%s3 + $0x8] sm:$0xff]
    %v137 = vld [vmem:[%s3 + $0x10] sm:$0xff]
    %v138 = vld [vmem:[%s3 + $0x18] sm:$0xff]
    %v139 = vld [vmem:[%s3 + $0x20] sm:$0xff]
    %v140 = vld [vmem:[%s3 + $0x28] sm:$0xff]
    %v141 = vld [vmem:[%s3 + $0x30] sm:$0xff]
    %v142 = vld [vmem:[%s3 + $0x38] sm:$0xff]
    %vm143 = vcmask 523264
    %v145 = vsel %vm143, %v131, 0
    %v148 = vsel %vm143, %v132, 0
    %150 = vmatprep.subr.mxu0 0.0
    %151 = vmatpush1.msra.mxu0 %v135
    %152 = vmatprep.subr.mxu0 0.0
    %153 = vmatpush1.msra.mxu0 %v136
    %154 = vmatprep.subr.mxu0 0.0
    %155 = vmatpush1.msra.mxu0 %v137
    %156 = vmatprep.subr.mxu0 0.0
    %157 = vmatpush1.msra.mxu0 %v138
    %158 = vmatprep.subr.mxu0 0.0
    %159 = vmatpush1.msra.mxu0 %v139
    %160 = vmatprep.subr.mxu0 0.0
    %161 = vmatpush1.msra.mxu0 %v140
    %162 = vmatprep.subr.mxu0 0.0
    %163 = vmatpush1.msra.mxu0 %v141
    %164 = vmatprep.subr.mxu0 0.0
    %165 = vmatpush1.msra.mxu0 %v142
    %166 = vmatprep.subr.mxu0 0.0
    %167 = vmatpush1.msra.mxu0 0.0
    %168 = vmatprep.subr.mxu0 0.0
    %169 = vmatpush1.msra.mxu0 0.0
    %170 = vmatprep.subr.mxu0 0.0
    %171 = vmatpush1.msra.mxu0 0.0
    %172 = vmatprep.subr.mxu0 0.0
    %173 = vmatpush1.msra.mxu0 0.0
    %174 = vmatprep.subr.mxu0 0.0
    %175 = vmatpush1.msra.mxu0 0.0
    %176 = vmatprep.subr.mxu0 0.0
    %177 = vmatpush1.msra.mxu0 0.0
    %178 = vmatprep.subr.mxu0 0.0
    %179 = vmatpush1.msra.mxu0 0.0
    %180 = vmatprep.subr.mxu0 0.0
    %181 = vmatpush1.msra.mxu0 0.0
    %182 = vmatprep.subr.mxu0 0.0
    %183 = vmatpush1.msra.mxu0 0.0
    %184 = vmatprep.subr.mxu0 0.0
    %185 = vmatpush1.msra.mxu0 0.0
    %186 = vmatprep.subr.mxu0 0.0
    %187 = vmatpush1.msra.mxu0 0.0
    %188 = vmatprep.subr.mxu0 0.0
    %189 = vmatpush1.msra.mxu0 0.0
    %190 = vmatprep.subr.mxu0 0.0
    %191 = vmatpush1.msra.mxu0 0.0
    %192 = vmatprep.subr.mxu0 0.0
    %193 = vmatpush1.msra.mxu0 0.0
    %194 = vmatprep.subr.mxu0 0.0
    %195 = vmatpush1.msra.mxu0 0.0
    %196 = vmatprep.subr.mxu0 0.0
    %197 = vmatpush1.msra.mxu0 0.0
    %198 = vmatprep.subr.mxu0 0.0
    %199 = vmatpush1.msra.mxu0 0.0
    %200 = vmatprep.subr.mxu0 0.0
    %201 = vmatpush1.msra.mxu0 0.0
    %202 = vmatprep.subr.mxu0 0.0
    %203 = vmatpush1.msra.mxu0 0.0
    %204 = vmatprep.subr.mxu0 0.0
    %205 = vmatpush1.msra.mxu0 0.0
    %206 = vmatprep.subr.mxu0 0.0
    %207 = vmatpush1.msra.mxu0 0.0
    %208 = vmatprep.subr.mxu0 0.0
    %209 = vmatpush1.msra.mxu0 0.0
    %210 = vmatprep.subr.mxu0 0.0
    %211 = vmatpush1.msra.mxu0 0.0
    %212 = vmatprep.subr.mxu0 0.0
    %213 = vmatpush1.msra.mxu0 0.0
    %214 = vmatprep.mubr.f32.mxu0 0.0
    %215 = vmatmul.mubr.f32.gmra.mrb[0].mxu0 %v145
    %v216 = vpop.f32.mrb[0].mxu0
    %v217 = vadd.f32 0.0, %v216
    %v218 = vpop.f32.mrb[0].mxu0
    %219 = vmatprep.mubr.f32.mxu0 0.0
    %220 = vmatmul.mubr.f32.gmra.mrb[0].mxu0 %v148
    %v221 = vpop.f32.mrb[0].mxu0
    %v222 = vadd.f32 0.0, %v221
    %v223 = vpop.f32.mrb[0].mxu0
    %224 = vdwg.mxu0
    %v225 = vadd.f32 %v133, %v217
    %v226 = vadd.f32 %v134, %v222
    %227 = vst.msk [vmem:[#allocation2] sm:$0xff] %vm41, %v225
    %228 = vst.msk [vmem:[#allocation2 + $0x8] sm:$0xff] %vm41, %v226
    // Predicated region
    $region26: #{tpu_custom_call.1} parent=1 // pred_check
      %p229 = pneg %p21
    $region27: #{tpu_custom_call.1} parent=1 // pred_check_branch
      %231 = sbr.rel (%p229) target = $region29
    $region28: #{tpu_custom_call.1} parent=1 // pred_region
      %v232 = vld [vmem:[#allocation2] sm:$0xff]
      %v233 = vld [vmem:[#allocation2 + $0x8] sm:$0xff]
      %v234 = vld [vmem:[%s4] sm:$0x1]
      %v236 = vlaneseq
      %v237 = vshrl.u32 %v236, 7
      %v238 = vsub.s32 0, %v237
      %v239 = vrot.slane %v234, %v238
      %v241 = vadd.f32 %v232, %v239
      %v242 = vadd.f32 %v233, %v239
      %243 = vst.msk [vmem:[#allocation2] sm:$0xff] %vm41, %v241
      %244 = vst.msk [vmem:[#allocation2 + $0x8] sm:$0xff] %vm41, %v242
    $region29: #{tpu_custom_call.1} parent=1 // pred_fallthru
      _
    // Predicated region
    $region30: #{tpu_custom_call.1} parent=1 // pred_check
      _
    $region31: #{tpu_custom_call.1} parent=1 // pred_check_branch
      %246 = sbr.rel (0) target = $region33
    $region32: #{tpu_custom_call.1} parent=1 // pred_region
      %s248 = ssub.s32 256, 256
      %249 = vsyncadd [#allocation3], %s248
      %s250 = sshll.u32 [#allocation2], 4
      %s251 = int_to_ptr.vmem [resolvable:$true] %s250
      %256 = dma.vmem_to_hbm [thread:$0]  %s251, 256, %s5, [#allocation3], 128, 128, 8
    $region33: #{tpu_custom_call.1} parent=1 // pred_fallthru
      _
    // Predicated region
    $region34: #{tpu_custom_call.1} parent=1 // pred_check
      _
    $region35: #{tpu_custom_call.1} parent=1 // pred_check_branch
      %258 = sbr.rel (0) target = $region37
    $region36: #{tpu_custom_call.1} parent=1 // pred_region
      %259 = dma.done [#allocation3], 256
    $region37: #{tpu_custom_call.1} parent=1 // pred_fallthru
      _
    %260 = vsyncpa [#allocation3], 1

</llo_original>
